<compile_context>
chip_gen: v7x
topology: tpu7x:2x2x1
jax: 0.10.0
libtpu: 0.0.40
codegen_flags: <defaults>
</compile_context>

<pallas_src>
import jax
import jax.numpy as jnp
from jax import lax
from jax.experimental import pallas as pl
from jax.experimental.pallas import tpu as pltpu


def _pick_bag_tile(batch):
    """Largest bag tile in {8..128} that still leaves >= 2 grid steps."""
    for t in (128, 64, 32, 16, 8):
        if batch >= 2 * t:
            return t
    return 8


def _make_kernel(bag_tile, vocab_size):
    def kernel(tok_ref, start_ref, end_ref,       # SMEM scalar prefetch
               emb_ref, w_ref, b_ref,             # VMEM: table, fc weight, fc bias
               out_ref,                           # VMEM (bag_tile, C_pad)
               acc_ref):                          # VMEM (bag_tile, D_pad) scratch
        # tok_ref:   (T,)   int32 flat token stream            (SMEM)
        # start_ref: (Bp,)  int32 bag start indices            (SMEM)
        # end_ref:   (Bp,)  int32 bag end indices (exclusive)  (SMEM)
        # emb_ref:   (V_pad, D_pad) f32 VMEM-resident embedding table
        # w_ref:     (D_pad, C_pad) f32 fc weight (pre-transposed, zero padded)
        # b_ref:     (1, C_pad)     f32 fc bias (zero padded)
        bt = pl.program_id(0)
        d_pad = acc_ref.shape[1]

        for j in range(bag_tile):                 # static unroll over bags in tile
            bag = bt * bag_tile + j
            start = start_ref[bag]
            n = end_ref[bag] - start              # tokens in this bag (dynamic)

            def body(i, carry, start=start):
                # gather one row from the VMEM-resident table (dynamic load)
                t = jnp.clip(tok_ref[start + i], 0, vocab_size - 1)
                return carry + emb_ref[pl.ds(t, 1), :]

            bag_sum = lax.fori_loop(0, n, body,
                                    jnp.zeros((1, d_pad), jnp.float32))
            # mean pooling; empty bag stays zero -> logits = bias
            inv = jnp.where(n > 0,
                            1.0 / jnp.maximum(n, 1).astype(jnp.float32),
                            0.0)
            acc_ref[j:j + 1, :] = bag_sum * inv

        # fused fc: (bag_tile, D_pad) @ (D_pad, C_pad) + bias, lane-dense store
        out_ref[...] = (jnp.dot(acc_ref[...], w_ref[...],
                                preferred_element_type=jnp.float32)
                        + b_ref[...])

    return kernel


def text_classification_forward(text, offsets, emb_w, fc_w, fc_b):
    """text: (T,) int token stream, offsets: (B,) bag starts, emb_w: (V, D),
    fc_w: (C, D), fc_b: (C,). Returns (B, C) f32 logits."""
    T = int(text.shape[0])
    B = int(offsets.shape[0])
    V, D = int(emb_w.shape[0]), int(emb_w.shape[1])
    C = int(fc_w.shape[0])

    D_pad = pl.cdiv(D, 128) * 128
    C_pad = pl.cdiv(C, 128) * 128
    V_pad = pl.cdiv(V, 8) * 8
    bag_tile = _pick_bag_tile(B)
    B_pad = pl.cdiv(B, bag_tile) * bag_tile

    tok = text.astype(jnp.int32)
    starts = offsets.astype(jnp.int32)
    ends = jnp.concatenate([starts[1:], jnp.array([T], dtype=jnp.int32)])
    if B_pad != B:
        pad = jnp.zeros((B_pad - B,), jnp.int32)      # padded bags are empty
        starts = jnp.concatenate([starts, pad])
        ends = jnp.concatenate([ends, pad])

    emb_p = jnp.pad(emb_w.astype(jnp.float32), ((0, V_pad - V), (0, D_pad - D)))
    w_p = jnp.pad(fc_w.T.astype(jnp.float32), ((0, D_pad - D), (0, C_pad - C)))
    b_p = jnp.pad(fc_b.astype(jnp.float32), (0, C_pad - C)).reshape(1, C_pad)

    grid_spec = pltpu.PrefetchScalarGridSpec(
        num_scalar_prefetch=3,
        grid=(B_pad // bag_tile,),
        in_specs=[
            # whole table, constant block index -> fetched once, VMEM-resident
            pl.BlockSpec((V_pad, D_pad), lambda bt, tok, st, en: (0, 0)),
            pl.BlockSpec((D_pad, C_pad), lambda bt, tok, st, en: (0, 0)),
            pl.BlockSpec((1, C_pad), lambda bt, tok, st, en: (0, 0)),
        ],
        out_specs=pl.BlockSpec((bag_tile, C_pad),
                               lambda bt, tok, st, en: (bt, 0)),
        scratch_shapes=[pltpu.VMEM((bag_tile, D_pad), jnp.float32)],
    )

    # Raise the scoped-VMEM limit only if the resident table needs it; stay
    # below v7x's 64 MiB physical VMEM.
    table_bytes = V_pad * D_pad * 4
    vmem_need = (2 * table_bytes                 # (double-buffered) table tile
                 + 2 * D_pad * C_pad * 4         # fc weight tile
                 + 2 * C_pad * 4                 # bias
                 + bag_tile * D_pad * 4          # accumulator scratch
                 + 2 * bag_tile * C_pad * 4)     # output tile
    vmem_limit = None
    if vmem_need > 24 * 1024 * 1024:
        vmem_limit = min(int(vmem_need * 5 // 4), 60 * 1024 * 1024)

    out = pl.pallas_call(
        _make_kernel(bag_tile, V),
        out_shape=jax.ShapeDtypeStruct((B_pad, C_pad), jnp.float32),
        grid_spec=grid_spec,
        compiler_params=pltpu.CompilerParams(
            dimension_semantics=("parallel",),
            vmem_limit_bytes=vmem_limit),
    )(tok, starts, ends, emb_p, w_p, b_p)

    return out[:B, :C]


def _reference(text, offsets, emb_w, fc_w, fc_b):
    T = text.shape[0]
    B = offsets.shape[0]
    ends = jnp.concatenate([offsets[1:], jnp.array([T], offsets.dtype)])
    rows = []
    for b in range(B):
        s, e = int(offsets[b]), int(ends[b])
        if e > s:
            rows.append(jnp.mean(emb_w[text[s:e]], axis=0))
        else:
            rows.append(jnp.zeros((emb_w.shape[1],), jnp.float32))
    pooled = jnp.stack(rows)
    return pooled @ fc_w.T + fc_b


if __name__ == "__main__":
    vocab_size, embed_dim, num_class = 1000, 64, 4
    B, T = 16, 200   # 16 bags over a flat stream of 200 tokens

    key = jax.random.PRNGKey(0)
    k_emb, k_fc, k_tok = jax.random.split(key, 3)

    # init_weights(): uniform(-0.5, 0.5) for embedding + fc weight, zero bias.
    initrange = 0.5
    emb_w = jax.random.uniform(k_emb, (vocab_size, embed_dim), jnp.float32,
                               -initrange, initrange)
    fc_w = jax.random.uniform(k_fc, (num_class, embed_dim), jnp.float32,
                              -initrange, initrange)
    fc_b = jnp.zeros((num_class,), jnp.float32)

    text = jax.random.randint(k_tok, (T,), 0, vocab_size, dtype=jnp.int32)
    # bag boundaries (note bag 1 is empty: 7 -> 7), last bag runs to T.
    offsets = jnp.array([0, 7, 7, 20, 33, 45, 58, 64,
                         80, 99, 120, 131, 150, 163, 170, 188],
                        dtype=jnp.int32)

    out = text_classification_forward(text, offsets, emb_w, fc_w, fc_b)
    out = jax.block_until_ready(out)

    ref = _reference(text, offsets, emb_w, fc_w, fc_b)
    assert out.shape == (B, num_class)
    assert jnp.allclose(out, ref, atol=1e-4, rtol=1e-4)
    print("KERNEL_OK")
</pallas_src>

<mosaic_0001>
module attributes {stable_mosaic.version = 11 : i64} {
  func.func @kernel(%arg0: i32, %arg1: memref<200xi32, #tpu.memory_space<smem>>, %arg2: memref<16xi32, #tpu.memory_space<smem>>, %arg3: memref<16xi32, #tpu.memory_space<smem>>, %arg4: memref<1000x128xf32, #tpu.memory_space<vmem>>, %arg5: memref<128x128xf32, #tpu.memory_space<vmem>>, %arg6: memref<1x128xf32, #tpu.memory_space<vmem>>, %arg7: memref<8x128xf32, #tpu.memory_space<vmem>>, %arg8: memref<8x128xf32, #tpu.memory_space<vmem>>) attributes {dimension_semantics = [#tpu.dimension_semantics<parallel>], iteration_bounds = array<i64: 2>, scalar_prefetch = 3 : i64, scratch_operands = 1 : i64, tpu.core_type = #tpu.core_type<tc>, window_params = [{pipeline_mode = #tpu.pipeline_mode<synchronous>, transform_indices = @transform_0, window_bounds = array<i64: 1000, 128>}, {pipeline_mode = #tpu.pipeline_mode<synchronous>, transform_indices = @transform_1, window_bounds = array<i64: 128, 128>}, {pipeline_mode = #tpu.pipeline_mode<synchronous>, transform_indices = @transform_2, window_bounds = array<i64: 1, 128>}, {transform_indices = @transform_3, window_bounds = array<i64: 8, 128>}]} {
    %c8_i32 = arith.constant 8 : i32
    %0 = arith.muli %arg0, %c8_i32 : i32
    %c0_i32 = arith.constant 0 : i32
    %1 = arith.addi %0, %c0_i32 : i32
    %2 = arith.index_cast %1 : i32 to index
    %3 = memref.load %arg2[%2] : memref<16xi32, #tpu.memory_space<smem>>
    %4 = arith.index_cast %1 : i32 to index
    %5 = memref.load %arg3[%4] : memref<16xi32, #tpu.memory_space<smem>>
    %6 = arith.subi %5, %3 : i32
    %cst = arith.constant 0.000000e+00 : f32
    %7 = vector.broadcast %cst : f32 to vector<1x128xf32>
    %c0_i32_0 = arith.constant 0 : i32
    %8 = arith.subi %6, %c0_i32_0 : i32
    %9 = arith.addi %c0_i32_0, %8 : i32
    %c1_i32 = arith.constant 1 : i32
    %10 = scf.for %arg9 = %c0_i32_0 to %9 step %c1_i32 iter_args(%arg10 = %7) -> (vector<1x128xf32>)  : i32 {
      %159 = arith.addi %3, %arg9 : i32
      %160 = arith.index_cast %159 : i32 to index
      %161 = memref.load %arg1[%160] : memref<200xi32, #tpu.memory_space<smem>>
      %c0_i32_79 = arith.constant 0 : i32
      %c999_i32 = arith.constant 999 : i32
      %162 = arith.maxsi %c0_i32_79, %161 : i32
      %163 = arith.minsi %c999_i32, %162 : i32
      %164 = arith.index_cast %163 : i32 to index
      %c0_80 = arith.constant 0 : index
      %165 = vector.load %arg4[%164, %c0_80] : memref<1000x128xf32, #tpu.memory_space<vmem>>, vector<1x128xf32>
      %166 = arith.addf %arg10, %165 : vector<1x128xf32>
      scf.yield %166 : vector<1x128xf32>
    }
    %c0_i32_1 = arith.constant 0 : i32
    %11 = arith.cmpi sgt, %6, %c0_i32_1 : i32
    %c1_i32_2 = arith.constant 1 : i32
    %12 = arith.maxsi %6, %c1_i32_2 : i32
    %13 = arith.sitofp %12 : i32 to f32
    %cst_3 = arith.constant 1.000000e+00 : f32
    %14 = arith.divf %cst_3, %13 : f32
    %cst_4 = arith.constant 0.000000e+00 : f32
    %15 = arith.select %11, %14, %cst_4 : f32
    %16 = vector.broadcast %15 : f32 to vector<1x128xf32>
    %17 = arith.mulf %10, %16 : vector<1x128xf32>
    %c0 = arith.constant 0 : index
    %c0_5 = arith.constant 0 : index
    %18 = vector.load %arg8[%c0, %c0_5] : memref<8x128xf32, #tpu.memory_space<vmem>>, vector<1x128xf32>
    tpu.vector_store %arg8[%c0, %c0_5], %17 {strides = array<i32>} : memref<8x128xf32, #tpu.memory_space<vmem>>, vector<1x128xf32>,
    %c8_i32_6 = arith.constant 8 : i32
    %19 = arith.muli %arg0, %c8_i32_6 : i32
    %c1_i32_7 = arith.constant 1 : i32
    %20 = arith.addi %19, %c1_i32_7 : i32
    %21 = arith.index_cast %20 : i32 to index
    %22 = memref.load %arg2[%21] : memref<16xi32, #tpu.memory_space<smem>>
    %23 = arith.index_cast %20 : i32 to index
    %24 = memref.load %arg3[%23] : memref<16xi32, #tpu.memory_space<smem>>
    %25 = arith.subi %24, %22 : i32
    %cst_8 = arith.constant 0.000000e+00 : f32
    %26 = vector.broadcast %cst_8 : f32 to vector<1x128xf32>
    %c0_i32_9 = arith.constant 0 : i32
    %27 = arith.subi %25, %c0_i32_9 : i32
    %28 = arith.addi %c0_i32_9, %27 : i32
    %c1_i32_10 = arith.constant 1 : i32
    %29 = scf.for %arg9 = %c0_i32_9 to %28 step %c1_i32_10 iter_args(%arg10 = %26) -> (vector<1x128xf32>)  : i32 {
      %159 = arith.addi %22, %arg9 : i32
      %160 = arith.index_cast %159 : i32 to index
      %161 = memref.load %arg1[%160] : memref<200xi32, #tpu.memory_space<smem>>
      %c0_i32_79 = arith.constant 0 : i32
      %c999_i32 = arith.constant 999 : i32
      %162 = arith.maxsi %c0_i32_79, %161 : i32
      %163 = arith.minsi %c999_i32, %162 : i32
      %164 = arith.index_cast %163 : i32 to index
      %c0_80 = arith.constant 0 : index
      %165 = vector.load %arg4[%164, %c0_80] : memref<1000x128xf32, #tpu.memory_space<vmem>>, vector<1x128xf32>
      %166 = arith.addf %arg10, %165 : vector<1x128xf32>
      scf.yield %166 : vector<1x128xf32>
    }
    %c0_i32_11 = arith.constant 0 : i32
    %30 = arith.cmpi sgt, %25, %c0_i32_11 : i32
    %c1_i32_12 = arith.constant 1 : i32
    %31 = arith.maxsi %25, %c1_i32_12 : i32
    %32 = arith.sitofp %31 : i32 to f32
    %cst_13 = arith.constant 1.000000e+00 : f32
    %33 = arith.divf %cst_13, %32 : f32
    %cst_14 = arith.constant 0.000000e+00 : f32
    %34 = arith.select %30, %33, %cst_14 : f32
    %35 = vector.broadcast %34 : f32 to vector<1x128xf32>
    %36 = arith.mulf %29, %35 : vector<1x128xf32>
    %c1 = arith.constant 1 : index
    %c0_15 = arith.constant 0 : index
    %37 = vector.load %arg8[%c1, %c0_15] : memref<8x128xf32, #tpu.memory_space<vmem>>, vector<1x128xf32>
    tpu.vector_store %arg8[%c1, %c0_15], %36 {strides = array<i32>} : memref<8x128xf32, #tpu.memory_space<vmem>>, vector<1x128xf32>,
    %c8_i32_16 = arith.constant 8 : i32
    %38 = arith.muli %arg0, %c8_i32_16 : i32
    %c2_i32 = arith.constant 2 : i32
    %39 = arith.addi %38, %c2_i32 : i32
    %40 = arith.index_cast %39 : i32 to index
    %41 = memref.load %arg2[%40] : memref<16xi32, #tpu.memory_space<smem>>
    %42 = arith.index_cast %39 : i32 to index
    %43 = memref.load %arg3[%42] : memref<16xi32, #tpu.memory_space<smem>>
    %44 = arith.subi %43, %41 : i32
    %cst_17 = arith.constant 0.000000e+00 : f32
    %45 = vector.broadcast %cst_17 : f32 to vector<1x128xf32>
    %c0_i32_18 = arith.constant 0 : i32
    %46 = arith.subi %44, %c0_i32_18 : i32
    %47 = arith.addi %c0_i32_18, %46 : i32
    %c1_i32_19 = arith.constant 1 : i32
    %48 = scf.for %arg9 = %c0_i32_18 to %47 step %c1_i32_19 iter_args(%arg10 = %45) -> (vector<1x128xf32>)  : i32 {
      %159 = arith.addi %41, %arg9 : i32
      %160 = arith.index_cast %159 : i32 to index
      %161 = memref.load %arg1[%160] : memref<200xi32, #tpu.memory_space<smem>>
      %c0_i32_79 = arith.constant 0 : i32
      %c999_i32 = arith.constant 999 : i32
      %162 = arith.maxsi %c0_i32_79, %161 : i32
      %163 = arith.minsi %c999_i32, %162 : i32
      %164 = arith.index_cast %163 : i32 to index
      %c0_80 = arith.constant 0 : index
      %165 = vector.load %arg4[%164, %c0_80] : memref<1000x128xf32, #tpu.memory_space<vmem>>, vector<1x128xf32>
      %166 = arith.addf %arg10, %165 : vector<1x128xf32>
      scf.yield %166 : vector<1x128xf32>
    }
    %c0_i32_20 = arith.constant 0 : i32
    %49 = arith.cmpi sgt, %44, %c0_i32_20 : i32
    %c1_i32_21 = arith.constant 1 : i32
    %50 = arith.maxsi %44, %c1_i32_21 : i32
    %51 = arith.sitofp %50 : i32 to f32
    %cst_22 = arith.constant 1.000000e+00 : f32
    %52 = arith.divf %cst_22, %51 : f32
    %cst_23 = arith.constant 0.000000e+00 : f32
    %53 = arith.select %49, %52, %cst_23 : f32
    %54 = vector.broadcast %53 : f32 to vector<1x128xf32>
    %55 = arith.mulf %48, %54 : vector<1x128xf32>
    %c2 = arith.constant 2 : index
    %c0_24 = arith.constant 0 : index
    %56 = vector.load %arg8[%c2, %c0_24] : memref<8x128xf32, #tpu.memory_space<vmem>>, vector<1x128xf32>
    tpu.vector_store %arg8[%c2, %c0_24], %55 {strides = array<i32>} : memref<8x128xf32, #tpu.memory_space<vmem>>, vector<1x128xf32>,
    %c8_i32_25 = arith.constant 8 : i32
    %57 = arith.muli %arg0, %c8_i32_25 : i32
    %c3_i32 = arith.constant 3 : i32
    %58 = arith.addi %57, %c3_i32 : i32
    %59 = arith.index_cast %58 : i32 to index
    %60 = memref.load %arg2[%59] : memref<16xi32, #tpu.memory_space<smem>>
    %61 = arith.index_cast %58 : i32 to index
    %62 = memref.load %arg3[%61] : memref<16xi32, #tpu.memory_space<smem>>
    %63 = arith.subi %62, %60 : i32
    %cst_26 = arith.constant 0.000000e+00 : f32
    %64 = vector.broadcast %cst_26 : f32 to vector<1x128xf32>
    %c0_i32_27 = arith.constant 0 : i32
    %65 = arith.subi %63, %c0_i32_27 : i32
    %66 = arith.addi %c0_i32_27, %65 : i32
    %c1_i32_28 = arith.constant 1 : i32
    %67 = scf.for %arg9 = %c0_i32_27 to %66 step %c1_i32_28 iter_args(%arg10 = %64) -> (vector<1x128xf32>)  : i32 {
      %159 = arith.addi %60, %arg9 : i32
      %160 = arith.index_cast %159 : i32 to index
      %161 = memref.load %arg1[%160] : memref<200xi32, #tpu.memory_space<smem>>
      %c0_i32_79 = arith.constant 0 : i32
      %c999_i32 = arith.constant 999 : i32
      %162 = arith.maxsi %c0_i32_79, %161 : i32
      %163 = arith.minsi %c999_i32, %162 : i32
      %164 = arith.index_cast %163 : i32 to index
      %c0_80 = arith.constant 0 : index
      %165 = vector.load %arg4[%164, %c0_80] : memref<1000x128xf32, #tpu.memory_space<vmem>>, vector<1x128xf32>
      %166 = arith.addf %arg10, %165 : vector<1x128xf32>
      scf.yield %166 : vector<1x128xf32>
    }
    %c0_i32_29 = arith.constant 0 : i32
    %68 = arith.cmpi sgt, %63, %c0_i32_29 : i32
    %c1_i32_30 = arith.constant 1 : i32
    %69 = arith.maxsi %63, %c1_i32_30 : i32
    %70 = arith.sitofp %69 : i32 to f32
    %cst_31 = arith.constant 1.000000e+00 : f32
    %71 = arith.divf %cst_31, %70 : f32
    %cst_32 = arith.constant 0.000000e+00 : f32
    %72 = arith.select %68, %71, %cst_32 : f32
    %73 = vector.broadcast %72 : f32 to vector<1x128xf32>
    %74 = arith.mulf %67, %73 : vector<1x128xf32>
    %c3 = arith.constant 3 : index
    %c0_33 = arith.constant 0 : index
    %75 = vector.load %arg8[%c3, %c0_33] : memref<8x128xf32, #tpu.memory_space<vmem>>, vector<1x128xf32>
    tpu.vector_store %arg8[%c3, %c0_33], %74 {strides = array<i32>} : memref<8x128xf32, #tpu.memory_space<vmem>>, vector<1x128xf32>,
    %c8_i32_34 = arith.constant 8 : i32
    %76 = arith.muli %arg0, %c8_i32_34 : i32
    %c4_i32 = arith.constant 4 : i32
    %77 = arith.addi %76, %c4_i32 : i32
    %78 = arith.index_cast %77 : i32 to index
    %79 = memref.load %arg2[%78] : memref<16xi32, #tpu.memory_space<smem>>
    %80 = arith.index_cast %77 : i32 to index
    %81 = memref.load %arg3[%80] : memref<16xi32, #tpu.memory_space<smem>>
    %82 = arith.subi %81, %79 : i32
    %cst_35 = arith.constant 0.000000e+00 : f32
    %83 = vector.broadcast %cst_35 : f32 to vector<1x128xf32>
    %c0_i32_36 = arith.constant 0 : i32
    %84 = arith.subi %82, %c0_i32_36 : i32
    %85 = arith.addi %c0_i32_36, %84 : i32
    %c1_i32_37 = arith.constant 1 : i32
    %86 = scf.for %arg9 = %c0_i32_36 to %85 step %c1_i32_37 iter_args(%arg10 = %83) -> (vector<1x128xf32>)  : i32 {
      %159 = arith.addi %79, %arg9 : i32
      %160 = arith.index_cast %159 : i32 to index
      %161 = memref.load %arg1[%160] : memref<200xi32, #tpu.memory_space<smem>>
      %c0_i32_79 = arith.constant 0 : i32
      %c999_i32 = arith.constant 999 : i32
      %162 = arith.maxsi %c0_i32_79, %161 : i32
      %163 = arith.minsi %c999_i32, %162 : i32
      %164 = arith.index_cast %163 : i32 to index
      %c0_80 = arith.constant 0 : index
      %165 = vector.load %arg4[%164, %c0_80] : memref<1000x128xf32, #tpu.memory_space<vmem>>, vector<1x128xf32>
      %166 = arith.addf %arg10, %165 : vector<1x128xf32>
      scf.yield %166 : vector<1x128xf32>
    }
    %c0_i32_38 = arith.constant 0 : i32
    %87 = arith.cmpi sgt, %82, %c0_i32_38 : i32
    %c1_i32_39 = arith.constant 1 : i32
    %88 = arith.maxsi %82, %c1_i32_39 : i32
    %89 = arith.sitofp %88 : i32 to f32
    %cst_40 = arith.constant 1.000000e+00 : f32
    %90 = arith.divf %cst_40, %89 : f32
    %cst_41 = arith.constant 0.000000e+00 : f32
    %91 = arith.select %87, %90, %cst_41 : f32
    %92 = vector.broadcast %91 : f32 to vector<1x128xf32>
    %93 = arith.mulf %86, %92 : vector<1x128xf32>
    %c4 = arith.constant 4 : index
    %c0_42 = arith.constant 0 : index
    %94 = vector.load %arg8[%c4, %c0_42] : memref<8x128xf32, #tpu.memory_space<vmem>>, vector<1x128xf32>
    tpu.vector_store %arg8[%c4, %c0_42], %93 {strides = array<i32>} : memref<8x128xf32, #tpu.memory_space<vmem>>, vector<1x128xf32>,
    %c8_i32_43 = arith.constant 8 : i32
    %95 = arith.muli %arg0, %c8_i32_43 : i32
    %c5_i32 = arith.constant 5 : i32
    %96 = arith.addi %95, %c5_i32 : i32
    %97 = arith.index_cast %96 : i32 to index
    %98 = memref.load %arg2[%97] : memref<16xi32, #tpu.memory_space<smem>>
    %99 = arith.index_cast %96 : i32 to index
    %100 = memref.load %arg3[%99] : memref<16xi32, #tpu.memory_space<smem>>
    %101 = arith.subi %100, %98 : i32
    %cst_44 = arith.constant 0.000000e+00 : f32
    %102 = vector.broadcast %cst_44 : f32 to vector<1x128xf32>
    %c0_i32_45 = arith.constant 0 : i32
    %103 = arith.subi %101, %c0_i32_45 : i32
    %104 = arith.addi %c0_i32_45, %103 : i32
    %c1_i32_46 = arith.constant 1 : i32
    %105 = scf.for %arg9 = %c0_i32_45 to %104 step %c1_i32_46 iter_args(%arg10 = %102) -> (vector<1x128xf32>)  : i32 {
      %159 = arith.addi %98, %arg9 : i32
      %160 = arith.index_cast %159 : i32 to index
      %161 = memref.load %arg1[%160] : memref<200xi32, #tpu.memory_space<smem>>
      %c0_i32_79 = arith.constant 0 : i32
      %c999_i32 = arith.constant 999 : i32
      %162 = arith.maxsi %c0_i32_79, %161 : i32
      %163 = arith.minsi %c999_i32, %162 : i32
      %164 = arith.index_cast %163 : i32 to index
      %c0_80 = arith.constant 0 : index
      %165 = vector.load %arg4[%164, %c0_80] : memref<1000x128xf32, #tpu.memory_space<vmem>>, vector<1x128xf32>
      %166 = arith.addf %arg10, %165 : vector<1x128xf32>
      scf.yield %166 : vector<1x128xf32>
    }
    %c0_i32_47 = arith.constant 0 : i32
    %106 = arith.cmpi sgt, %101, %c0_i32_47 : i32
    %c1_i32_48 = arith.constant 1 : i32
    %107 = arith.maxsi %101, %c1_i32_48 : i32
    %108 = arith.sitofp %107 : i32 to f32
    %cst_49 = arith.constant 1.000000e+00 : f32
    %109 = arith.divf %cst_49, %108 : f32
    %cst_50 = arith.constant 0.000000e+00 : f32
    %110 = arith.select %106, %109, %cst_50 : f32
    %111 = vector.broadcast %110 : f32 to vector<1x128xf32>
    %112 = arith.mulf %105, %111 : vector<1x128xf32>
    %c5 = arith.constant 5 : index
    %c0_51 = arith.constant 0 : index
    %113 = vector.load %arg8[%c5, %c0_51] : memref<8x128xf32, #tpu.memory_space<vmem>>, vector<1x128xf32>
    tpu.vector_store %arg8[%c5, %c0_51], %112 {strides = array<i32>} : memref<8x128xf32, #tpu.memory_space<vmem>>, vector<1x128xf32>,
    %c8_i32_52 = arith.constant 8 : i32
    %114 = arith.muli %arg0, %c8_i32_52 : i32
    %c6_i32 = arith.constant 6 : i32
    %115 = arith.addi %114, %c6_i32 : i32
    %116 = arith.index_cast %115 : i32 to index
    %117 = memref.load %arg2[%116] : memref<16xi32, #tpu.memory_space<smem>>
    %118 = arith.index_cast %115 : i32 to index
    %119 = memref.load %arg3[%118] : memref<16xi32, #tpu.memory_space<smem>>
    %120 = arith.subi %119, %117 : i32
    %cst_53 = arith.constant 0.000000e+00 : f32
    %121 = vector.broadcast %cst_53 : f32 to vector<1x128xf32>
    %c0_i32_54 = arith.constant 0 : i32
    %122 = arith.subi %120, %c0_i32_54 : i32
    %123 = arith.addi %c0_i32_54, %122 : i32
    %c1_i32_55 = arith.constant 1 : i32
    %124 = scf.for %arg9 = %c0_i32_54 to %123 step %c1_i32_55 iter_args(%arg10 = %121) -> (vector<1x128xf32>)  : i32 {
      %159 = arith.addi %117, %arg9 : i32
      %160 = arith.index_cast %159 : i32 to index
      %161 = memref.load %arg1[%160] : memref<200xi32, #tpu.memory_space<smem>>
      %c0_i32_79 = arith.constant 0 : i32
      %c999_i32 = arith.constant 999 : i32
      %162 = arith.maxsi %c0_i32_79, %161 : i32
      %163 = arith.minsi %c999_i32, %162 : i32
      %164 = arith.index_cast %163 : i32 to index
      %c0_80 = arith.constant 0 : index
      %165 = vector.load %arg4[%164, %c0_80] : memref<1000x128xf32, #tpu.memory_space<vmem>>, vector<1x128xf32>
      %166 = arith.addf %arg10, %165 : vector<1x128xf32>
      scf.yield %166 : vector<1x128xf32>
    }
    %c0_i32_56 = arith.constant 0 : i32
    %125 = arith.cmpi sgt, %120, %c0_i32_56 : i32
    %c1_i32_57 = arith.constant 1 : i32
    %126 = arith.maxsi %120, %c1_i32_57 : i32
    %127 = arith.sitofp %126 : i32 to f32
    %cst_58 = arith.constant 1.000000e+00 : f32
    %128 = arith.divf %cst_58, %127 : f32
    %cst_59 = arith.constant 0.000000e+00 : f32
    %129 = arith.select %125, %128, %cst_59 : f32
    %130 = vector.broadcast %129 : f32 to vector<1x128xf32>
    %131 = arith.mulf %124, %130 : vector<1x128xf32>
    %c6 = arith.constant 6 : index
    %c0_60 = arith.constant 0 : index
    %132 = vector.load %arg8[%c6, %c0_60] : memref<8x128xf32, #tpu.memory_space<vmem>>, vector<1x128xf32>
    tpu.vector_store %arg8[%c6, %c0_60], %131 {strides = array<i32>} : memref<8x128xf32, #tpu.memory_space<vmem>>, vector<1x128xf32>,
    %c8_i32_61 = arith.constant 8 : i32
    %133 = arith.muli %arg0, %c8_i32_61 : i32
    %c7_i32 = arith.constant 7 : i32
    %134 = arith.addi %133, %c7_i32 : i32
    %135 = arith.index_cast %134 : i32 to index
    %136 = memref.load %arg2[%135] : memref<16xi32, #tpu.memory_space<smem>>
    %137 = arith.index_cast %134 : i32 to index
    %138 = memref.load %arg3[%137] : memref<16xi32, #tpu.memory_space<smem>>
    %139 = arith.subi %138, %136 : i32
    %cst_62 = arith.constant 0.000000e+00 : f32
    %140 = vector.broadcast %cst_62 : f32 to vector<1x128xf32>
    %c0_i32_63 = arith.constant 0 : i32
    %141 = arith.subi %139, %c0_i32_63 : i32
    %142 = arith.addi %c0_i32_63, %141 : i32
    %c1_i32_64 = arith.constant 1 : i32
    %143 = scf.for %arg9 = %c0_i32_63 to %142 step %c1_i32_64 iter_args(%arg10 = %140) -> (vector<1x128xf32>)  : i32 {
      %159 = arith.addi %136, %arg9 : i32
      %160 = arith.index_cast %159 : i32 to index
      %161 = memref.load %arg1[%160] : memref<200xi32, #tpu.memory_space<smem>>
      %c0_i32_79 = arith.constant 0 : i32
      %c999_i32 = arith.constant 999 : i32
      %162 = arith.maxsi %c0_i32_79, %161 : i32
      %163 = arith.minsi %c999_i32, %162 : i32
      %164 = arith.index_cast %163 : i32 to index
      %c0_80 = arith.constant 0 : index
      %165 = vector.load %arg4[%164, %c0_80] : memref<1000x128xf32, #tpu.memory_space<vmem>>, vector<1x128xf32>
      %166 = arith.addf %arg10, %165 : vector<1x128xf32>
      scf.yield %166 : vector<1x128xf32>
    }
    %c0_i32_65 = arith.constant 0 : i32
    %144 = arith.cmpi sgt, %139, %c0_i32_65 : i32
    %c1_i32_66 = arith.constant 1 : i32
    %145 = arith.maxsi %139, %c1_i32_66 : i32
    %146 = arith.sitofp %145 : i32 to f32
    %cst_67 = arith.constant 1.000000e+00 : f32
    %147 = arith.divf %cst_67, %146 : f32
    %cst_68 = arith.constant 0.000000e+00 : f32
    %148 = arith.select %144, %147, %cst_68 : f32
    %149 = vector.broadcast %148 : f32 to vector<1x128xf32>
    %150 = arith.mulf %143, %149 : vector<1x128xf32>
    %c7 = arith.constant 7 : index
    %c0_69 = arith.constant 0 : index
    %151 = vector.load %arg8[%c7, %c0_69] : memref<8x128xf32, #tpu.memory_space<vmem>>, vector<1x128xf32>
    tpu.vector_store %arg8[%c7, %c0_69], %150 {strides = array<i32>} : memref<8x128xf32, #tpu.memory_space<vmem>>, vector<1x128xf32>,
    %c0_70 = arith.constant 0 : index
    %c0_71 = arith.constant 0 : index
    %152 = vector.load %arg8[%c0_70, %c0_71] : memref<8x128xf32, #tpu.memory_space<vmem>>, vector<8x128xf32>
    %c0_72 = arith.constant 0 : index
    %c0_73 = arith.constant 0 : index
    %153 = vector.load %arg5[%c0_72, %c0_73] : memref<128x128xf32, #tpu.memory_space<vmem>>, vector<128x128xf32>
    %cst_74 = arith.constant dense<0.000000e+00> : vector<8x128xf32>
    %154 = tpu.matmul %152, %153, %cst_74 {dimension_numbers = #tpu.dot_dimension_numbers<[1], [0], [0], [1], [0, 0, 1, 1], [], []>} : vector<8x128xf32>, vector<128x128xf32>, vector<8x128xf32> -> vector<8x128xf32>
    %c0_75 = arith.constant 0 : index
    %c0_76 = arith.constant 0 : index
    %155 = vector.load %arg6[%c0_75, %c0_76] : memref<1x128xf32, #tpu.memory_space<vmem>>, vector<1x128xf32>
    %156 = vector.broadcast %155 : vector<1x128xf32> to vector<8x128xf32>
    %157 = arith.addf %154, %156 : vector<8x128xf32>
    %c0_77 = arith.constant 0 : index
    %c0_78 = arith.constant 0 : index
    %158 = vector.load %arg7[%c0_77, %c0_78] : memref<8x128xf32, #tpu.memory_space<vmem>>, vector<8x128xf32>
    tpu.vector_store %arg7[%c0_77, %c0_78], %157 {strides = array<i32>} : memref<8x128xf32, #tpu.memory_space<vmem>>, vector<8x128xf32>,
    return
  }
  func.func @transform_0(%arg0: i32, %arg1: memref<200xi32, #tpu.memory_space<smem>>, %arg2: memref<16xi32, #tpu.memory_space<smem>>, %arg3: memref<16xi32, #tpu.memory_space<smem>>) -> (i32, i32) {
    %c0_i32 = arith.constant 0 : i32
    %c0_i32_0 = arith.constant 0 : i32
    %c0_i32_1 = arith.constant 0 : i32
    return %c0_i32, %c0_i32_0 : i32, i32
  }
  func.func @transform_1(%arg0: i32, %arg1: memref<200xi32, #tpu.memory_space<smem>>, %arg2: memref<16xi32, #tpu.memory_space<smem>>, %arg3: memref<16xi32, #tpu.memory_space<smem>>) -> (i32, i32) {
    %c0_i32 = arith.constant 0 : i32
    %c0_i32_0 = arith.constant 0 : i32
    %c0_i32_1 = arith.constant 0 : i32
    return %c0_i32, %c0_i32_0 : i32, i32
  }
  func.func @transform_2(%arg0: i32, %arg1: memref<200xi32, #tpu.memory_space<smem>>, %arg2: memref<16xi32, #tpu.memory_space<smem>>, %arg3: memref<16xi32, #tpu.memory_space<smem>>) -> (i32, i32) {
    %c0_i32 = arith.constant 0 : i32
    %c0_i32_0 = arith.constant 0 : i32
    %c0_i32_1 = arith.constant 0 : i32
    return %c0_i32, %c0_i32_0 : i32, i32
  }
  func.func @transform_3(%arg0: i32, %arg1: memref<200xi32, #tpu.memory_space<smem>>, %arg2: memref<16xi32, #tpu.memory_space<smem>>, %arg3: memref<16xi32, #tpu.memory_space<smem>>) -> (i32, i32) {
    %c0_i32 = arith.constant 0 : i32
    %c0_i32_0 = arith.constant 0 : i32
    return %arg0, %c0_i32 : i32, i32
  }
}

</mosaic_0001>

<llo_original>
// kernel: tpu_custom_call.1
$region0: #{tpu_custom_call.1}
  #allocation0 [shape = 'u32[]', space=smem, size = 0x4, offset = 0x4, fixed_abs, tag = 'smem constant byte address 0x4 - core index']
  #allocation1 [shape = 'u32[144,128]{1,0:T(1,128)}', space=vmem, size = 0x12000, scoped, tag = 'internal scratch']
  #allocation2 [shape = 'f32[8,128]{1,0:T(8,128)}', space=vmem, size = 0x1000, scoped, tag = 'scratch operand']
  #allocation3 [shape = 's32[1]{0}', space=sflag, size = 0x4, scoped, tag = 'scoped memory for tpu_custom_call.1']
  #allocation4 [shape = 'u8[1024]{0}', space=smem, size = 0x400, scoped, tag = 'prefetched SMEM operand 0']
  #allocation5 [shape = 'u8[512]{0}', space=smem, size = 0x200, scoped, tag = 'prefetched SMEM operand 1']
  #allocation6 [shape = 'u8[512]{0}', space=smem, size = 0x200, scoped, tag = 'prefetched SMEM operand 2']
  %s0 = inlined_call_operand.hbm [shape: s32[200], index: 0, kind: input, shape index: {}]
  %s1 = inlined_call_operand.vmem [shape: s32[16], index: 1, kind: input, shape index: {}]
  %s2 = inlined_call_operand.vmem [shape: s32[16], index: 2, kind: input, shape index: {}]
  %s3 = inlined_call_operand.hbm [shape: f32[1000,128], index: 3, kind: input, shape index: {}]
  %s4 = inlined_call_operand.hbm [shape: f32[128,128], index: 4, kind: input, shape index: {}]
  %s5 = inlined_call_operand.vmem [shape: f32[1,128], index: 5, kind: input, shape index: {}]
  %s6 = inlined_call_operand.hbm [shape: f32[16,128], index: 6, kind: output, shape index: {}]
  %s7 = sld [smem:[#allocation0]]
  $region109: #{tpu_custom_call.1} parent=0
    _
  %s9 = ssub.s32 1, %s7
  %s10 = scalar_select 0, %s9, %s7
  %12 = dma.hbm_to_smem %s0, 32, [#allocation4], [#allocation3]
  %s13 = sshll.u32 %s1, 4
  %s14 = int_to_ptr.vmem [resolvable:$true] %s13
  %16 = dma.vmem_to_smem %s14, 16, [#allocation5], [#allocation3]
  %s17 = sshll.u32 %s2, 4
  %s18 = int_to_ptr.vmem [resolvable:$true] %s17
  %20 = dma.vmem_to_smem %s18, 16, [#allocation6], [#allocation3]
  %21 = dma.done [#allocation3], 64
  %22 = sfence
  $region1: #{tpu_custom_call.1} parent=0
    #allocation7 [shape = 'u8[512000]{0}', space=vmem, size = 0x7d000, scoped, tag = 'input window, operand 3, single buffered']
    #allocation8 [shape = 's32[2]{0}', space=sflag, size = 0x8, scoped, tag = 'scoped memory for tpu_custom_call.1']
    #allocation9 [shape = 's32[2]{0}', space=sflag, size = 0x8, scoped, tag = 'scoped memory for tpu_custom_call.1']
    #allocation10 [shape = 'u8[65536]{0}', space=vmem, size = 0x10000, scoped, tag = 'input window, operand 4, single buffered']
    #allocation11 [shape = 's32[1]{0}', space=sflag, size = 0x4, scoped, tag = 'scoped memory for tpu_custom_call.1']
    #allocation12 [shape = 'u8[8192]{0}', space=vmem, size = 0x2000, scoped, tag = 'output window, operand 0']
    %23 = vsyncpa [#allocation8], 0
    %24 = vsyncpa [#allocation11], 0
    %25 = vsyncpa [#allocation9], 0
    %s26 = scalar_lea.sflag [#allocation9], 1
    %27 = vsyncpa %s26, 0
    loop: start=0, step=1, limit=4
    $region2: #{tpu_custom_call.1} parent=1 // loop_pre_header
      _
    $region3: #{tpu_custom_call.1} parent=1 // loop_header
      %s29 = sphi 0, %s33
      %p30 = scmp.ge.s32.totalorder %s29, 4
      %s37 = sphi 0, %s37
      %s39 = sphi 0, %s37
      %s40 = sphi 0, %s39
      %s54 = sphi 0, %s40
      %s58 = sphi 0, %s58
      %s60 = sphi 0, %s58
      %s61 = sphi 0, %s60
      %s75 = sphi 0, %s61
      %s79 = sphi 0, %s79
      %s81 = sphi 0, %s79
      %s82 = sphi 0, %s81
      %s96 = sphi 0, %s82
      %s102 = sphi 0, %s104
      %s105 = sphi 0, %s102
      %s106 = sphi 0, %s105
      %s122 = sphi 0, %s106
    $region4: #{tpu_custom_call.1} parent=1 // loop_header_branch
      %32 = sbr.rel (%p30) target = $region8
    $region5: #{tpu_custom_call.1} parent=1 // loop_body
      %s34 = ssub.s32 %s29, 1
      %s35 = ssub.s32 %s29, 2
      %s36 = sadd.s32 %s29, 1
      %s38 = sadd.s32 %s37, 1
      %p41 = scmp.eq.s32.totalorder %s29, 1
      %p42 = scmp.ne.s32.totalorder %s37, %s39
      %p43 = scmp.eq.s32.totalorder %s29, 0
      %p44 = por %p42, %p43
      %p45 = scmp.ne.s32.totalorder %s37, %s39
      %p46 = scmp.eq.s32.totalorder %s34, 1
      %p47 = por %p45, %p46
      %p48 = scmp.ne.s32.totalorder %s39, %s40
      %p49 = scmp.eq.s32.totalorder %s34, 0
      %p50 = por %p48, %p49
      %p51 = scmp.ne.s32.totalorder %s39, %s40
      %p52 = scmp.eq.s32.totalorder %s35, 1
      %p53 = por %p51, %p52
      %p55 = scmp.ne.s32.totalorder %s40, %s54
      %p56 = scmp.eq.s32.totalorder %s35, 0
      %p57 = por %p55, %p56
      %s59 = sadd.s32 %s58, 1
      %p62 = scmp.eq.s32.totalorder %s29, 1
      %p63 = scmp.ne.s32.totalorder %s58, %s60
      %p64 = scmp.eq.s32.totalorder %s29, 0
      %p65 = por %p63, %p64
      %p66 = scmp.ne.s32.totalorder %s58, %s60
      %p67 = scmp.eq.s32.totalorder %s34, 1
      %p68 = por %p66, %p67
      %p69 = scmp.ne.s32.totalorder %s60, %s61
      %p70 = scmp.eq.s32.totalorder %s34, 0
      %p71 = por %p69, %p70
      %p72 = scmp.ne.s32.totalorder %s60, %s61
      %p73 = scmp.eq.s32.totalorder %s35, 1
      %p74 = por %p72, %p73
      %p76 = scmp.ne.s32.totalorder %s61, %s75
      %p77 = scmp.eq.s32.totalorder %s35, 0
      %p78 = por %p76, %p77
      %s80 = sadd.s32 %s79, 1
      %p83 = scmp.eq.s32.totalorder %s29, 1
      %p84 = scmp.ne.s32.totalorder %s79, %s81
      %p85 = scmp.eq.s32.totalorder %s29, 0
      %p86 = por %p84, %p85
      %p87 = scmp.ne.s32.totalorder %s79, %s81
      %p88 = scmp.eq.s32.totalorder %s34, 1
      %p89 = por %p87, %p88
      %p90 = scmp.ne.s32.totalorder %s81, %s82
      %p91 = scmp.eq.s32.totalorder %s34, 0
      %p92 = por %p90, %p91
      %p93 = scmp.ne.s32.totalorder %s81, %s82
      %p94 = scmp.eq.s32.totalorder %s35, 1
      %p95 = por %p93, %p94
      %p97 = scmp.ne.s32.totalorder %s82, %s96
      %p98 = scmp.eq.s32.totalorder %s35, 0
      %p99 = por %p97, %p98
      %s100 = ssub.s32 %s29, %s36
      %p101 = scmp.eq.s32.totalorder %s100, 0
      %s103 = sadd.s32 %s102, 1
      %s104 = scalar_select %p101, %s102, %s103
      %p107 = pneg %p101
      %p108 = scmp.eq.s32.totalorder %s29, 1
      %p109 = por %p107, %p108
      %p110 = scmp.ne.s32.totalorder %s102, %s105
      %p111 = scmp.eq.s32.totalorder %s29, 0
      %p112 = por %p110, %p111
      %p113 = scmp.ne.s32.totalorder %s102, %s105
      %p114 = scmp.eq.s32.totalorder %s34, 1
      %p115 = por %p113, %p114
      %p116 = scmp.ne.s32.totalorder %s105, %s106
      %p117 = scmp.eq.s32.totalorder %s34, 0
      %p118 = por %p116, %p117
      %p119 = scmp.ne.s32.totalorder %s105, %s106
      %p120 = scmp.eq.s32.totalorder %s35, 1
      %p121 = por %p119, %p120
      %p123 = scmp.ne.s32.totalorder %s106, %s122
      %p124 = scmp.eq.s32.totalorder %s35, 0
      %p125 = por %p123, %p124
      %p126 = scmp.le.s32.totalorder 1, %s29
      %p127 = scmp.lt.s32.totalorder %s29, 3
      %p128 = pnand %p126, %p127
      %p129 = pneg %p128
      // Predicated region
      $region9: #{tpu_custom_call.1} parent=5 // pred_check
        _
      $region10: #{tpu_custom_call.1} parent=5 // pred_check_branch
        %131 = sbr.rel (%p128) target = $region12
      $region11: #{tpu_custom_call.1} parent=5 // pred_region
        %s132 = ssub.s32 %s29, 1
        // Predicated region
        $region13: #{tpu_custom_call.1} parent=11 // pred_check
          %p133 = pneg %p50
        $region14: #{tpu_custom_call.1} parent=11 // pred_check_branch
          %135 = sbr.rel (%p133) target = $region16
        $region15: #{tpu_custom_call.1} parent=11 // pred_region
          %s137 = ssub.s32 16000, 16000
          %138 = vsyncadd [#allocation8], %s137
          %s139 = sshll.u32 [#allocation7], 4
          %s140 = int_to_ptr.vmem [resolvable:$true] %s139
          %145 = dma.hbm_to_vmem [thread:$0]  %s3, 16000, %s140, [#allocation8], 128, 128, 8
        $region16: #{tpu_custom_call.1} parent=11 // pred_fallthru
          _
        // Predicated region
        $region17: #{tpu_custom_call.1} parent=11 // pred_check
          %p146 = pneg %p71
        $region18: #{tpu_custom_call.1} parent=11 // pred_check_branch
          %148 = sbr.rel (%p146) target = $region20
        $region19: #{tpu_custom_call.1} parent=11 // pred_region
          %s150 = ssub.s32 2048, 2048
          %151 = vsyncadd [#allocation11], %s150
          %s152 = sshll.u32 [#allocation10], 4
          %s153 = int_to_ptr.vmem [resolvable:$true] %s152
          %158 = dma.hbm_to_vmem [thread:$0]  %s4, 2048, %s153, [#allocation11], 128, 128, 8
        $region20: #{tpu_custom_call.1} parent=11 // pred_fallthru
          _
        // Predicated region
        $region21: #{tpu_custom_call.1} parent=11 // pred_check
          %p159 = pneg %p92
        $region22: #{tpu_custom_call.1} parent=11 // pred_check_branch
          %161 = sbr.rel (%p159) target = $region24
        $region23: #{tpu_custom_call.1} parent=11 // pred_region
          _
        $region24: #{tpu_custom_call.1} parent=11 // pred_fallthru
          _
      $region12: #{tpu_custom_call.1} parent=5 // pred_fallthru
        _
      %p162 = scmp.lt.s32.totalorder %s29, 2
      // Predicated region
      $region25: #{tpu_custom_call.1} parent=5 // pred_check
        %p163 = pneg %p162
      $region26: #{tpu_custom_call.1} parent=5 // pred_check_branch
        %165 = sbr.rel (%p163) target = $region28
      $region27: #{tpu_custom_call.1} parent=5 // pred_region
        _
      $region28: #{tpu_custom_call.1} parent=5 // pred_fallthru
        _
      %p166 = scmp.le.s32.totalorder 1, %s29
      %p167 = scmp.lt.s32.totalorder %s29, 3
      %p168 = pnand %p166, %p167
      %p169 = pneg %p168
      // Predicated region
      $region29: #{tpu_custom_call.1} parent=5 // pred_check
        _
      $region30: #{tpu_custom_call.1} parent=5 // pred_check_branch
        %171 = sbr.rel (%p168) target = $region32
      $region31: #{tpu_custom_call.1} parent=5 // pred_region
        %s172 = ssub.s32 %s29, 1
        // Predicated region
        $region33: #{tpu_custom_call.1} parent=31 // pred_check
          %p173 = pneg %p50
        $region34: #{tpu_custom_call.1} parent=31 // pred_check_branch
          %175 = sbr.rel (%p173) target = $region36
        $region35: #{tpu_custom_call.1} parent=31 // pred_region
          %176 = dma.done [#allocation8], 16000
        $region36: #{tpu_custom_call.1} parent=31 // pred_fallthru
          _
        // Predicated region
        $region37: #{tpu_custom_call.1} parent=31 // pred_check
          %p177 = pneg %p71
        $region38: #{tpu_custom_call.1} parent=31 // pred_check_branch
          %179 = sbr.rel (%p177) target = $region40
        $region39: #{tpu_custom_call.1} parent=31 // pred_region
          %180 = dma.done [#allocation11], 2048
        $region40: #{tpu_custom_call.1} parent=31 // pred_fallthru
          _
        %p181 = pneg %p50
        %p182 = pneg %p47
        %p183 = pneg %p71
        %p184 = pneg %p68
        %p185 = pneg %p92
        %p186 = pneg %p89
        %p187 = pneg %p118
        %p188 = pneg %p115
        %s189 = sand.u32 %s105, 1
        %s190 = scalar_lea.sflag [#allocation9], %s189
        %s191 = sand.u32 %s105, 1
        %s192 = smul.addr %s191, 8
        %s193 = scalar_lea.vmem [#allocation12], %s192
        %s194 = smul.u32 %s34, 8
        %s195 = sld [smem:[#allocation5 + %s194]]
        %s196 = sld [smem:[#allocation6 + %s194]]
        %s197 = ssub.s32 %s196, %s195
        // While loop
        $region41: #{tpu_custom_call.1} parent=31 // loop_pre_header
          _
        $region42: #{tpu_custom_call.1} parent=31 // loop_header
          %s199 = sphi 0, %s201
          %p200 = scmp.ge.s32.totalorder %s199, %s197
          %v204 = vphi 0.0, %v213
        $region43: #{tpu_custom_call.1} parent=31 // loop_header_branch
          %203 = sbr.rel (%p200) target = $region47
        $region44: #{tpu_custom_call.1} parent=31 // loop_body
          %s205 = sadd.s32 %s195, %s199
          %s206 = sld [smem:[#allocation4 + %s205]]
          %p207 = scmp.gt.s32.totalorder %s206, 0
          %s208 = scalar_select %p207, %s206, 0
          %p209 = scmp.lt.s32.totalorder %s208, 999
          %s210 = scalar_select %p209, %s208, 999
          %s211 = scalar_lea.vmem [#allocation7], %s210
          %v212 = vld [vmem:[%s211] sm:$0x1]
          %v213 = vadd.f32 %v204, %v212
        $region45: #{tpu_custom_call.1} parent=31 // loop_footer
          %s201 = sadd.s32 %s199, 1
        $region46: #{tpu_custom_call.1} parent=31 // loop_footer_branch
          %198 = sbr.rel target = $region42
        $region47: #{tpu_custom_call.1} parent=31 // loop_exit
          _
        %p214 = scmp.gt.s32.totalorder %s197, 0
        %p215 = scmp.gt.s32.totalorder %s197, 1
        %s216 = scalar_select %p215, %s197, 1
        %s217 = scvt.s32.f32 %s216
        %v218 = vstv %s217
        %v219 = vrcp.pop %v218
        %s220 = vtos %v219
        %s221 = scalar_select %p214, %s220, 0.0
        %v222 = vstv %s221
        %v223 = vmul.f32 %v204, %v222
        %224 = vst [vmem:[#allocation2] sm:$0x1] %v223
        %s225 = sadd.s32 %s194, 1
        %s226 = sld [smem:[#allocation5 + %s225]]
        %s227 = sld [smem:[#allocation6 + %s225]]
        %s228 = ssub.s32 %s227, %s226
        // While loop
        $region48: #{tpu_custom_call.1} parent=31 // loop_pre_header
          _
        $region49: #{tpu_custom_call.1} parent=31 // loop_header
          %s230 = sphi 0, %s232
          %p231 = scmp.ge.s32.totalorder %s230, %s228
          %v235 = vphi 0.0, %v244
        $region50: #{tpu_custom_call.1} parent=31 // loop_header_branch
          %234 = sbr.rel (%p231) target = $region54
        $region51: #{tpu_custom_call.1} parent=31 // loop_body
          %s236 = sadd.s32 %s226, %s230
          %s237 = sld [smem:[#allocation4 + %s236]]
          %p238 = scmp.gt.s32.totalorder %s237, 0
          %s239 = scalar_select %p238, %s237, 0
          %p240 = scmp.lt.s32.totalorder %s239, 999
          %s241 = scalar_select %p240, %s239, 999
          %s242 = scalar_lea.vmem [#allocation7], %s241
          %v243 = vld [vmem:[%s242] sm:$0x1]
          %v244 = vadd.f32 %v235, %v243
        $region52: #{tpu_custom_call.1} parent=31 // loop_footer
          %s232 = sadd.s32 %s230, 1
        $region53: #{tpu_custom_call.1} parent=31 // loop_footer_branch
          %229 = sbr.rel target = $region49
        $region54: #{tpu_custom_call.1} parent=31 // loop_exit
          _
        %p245 = scmp.gt.s32.totalorder %s228, 0
        %p246 = scmp.gt.s32.totalorder %s228, 1
        %s247 = scalar_select %p246, %s228, 1
        %s248 = scvt.s32.f32 %s247
        %v249 = vstv %s248
        %v250 = vrcp.pop %v249
        %s251 = vtos %v250
        %s252 = scalar_select %p245, %s251, 0.0
        %v253 = vstv %s252
        %v254 = vmul.f32 %v235, %v253
        %255 = vst [vmem:[#allocation2 + $0x1] sm:$0x1] %v254
        %s256 = sadd.s32 %s194, 2
        %s257 = sld [smem:[#allocation5 + %s256]]
        %s258 = sld [smem:[#allocation6 + %s256]]
        %s259 = ssub.s32 %s258, %s257
        // While loop
        $region55: #{tpu_custom_call.1} parent=31 // loop_pre_header
          _
        $region56: #{tpu_custom_call.1} parent=31 // loop_header
          %s261 = sphi 0, %s263
          %p262 = scmp.ge.s32.totalorder %s261, %s259
          %v266 = vphi 0.0, %v275
        $region57: #{tpu_custom_call.1} parent=31 // loop_header_branch
          %265 = sbr.rel (%p262) target = $region61
        $region58: #{tpu_custom_call.1} parent=31 // loop_body
          %s267 = sadd.s32 %s257, %s261
          %s268 = sld [smem:[#allocation4 + %s267]]
          %p269 = scmp.gt.s32.totalorder %s268, 0
          %s270 = scalar_select %p269, %s268, 0
          %p271 = scmp.lt.s32.totalorder %s270, 999
          %s272 = scalar_select %p271, %s270, 999
          %s273 = scalar_lea.vmem [#allocation7], %s272
          %v274 = vld [vmem:[%s273] sm:$0x1]
          %v275 = vadd.f32 %v266, %v274
        $region59: #{tpu_custom_call.1} parent=31 // loop_footer
          %s263 = sadd.s32 %s261, 1
        $region60: #{tpu_custom_call.1} parent=31 // loop_footer_branch
          %260 = sbr.rel target = $region56
        $region61: #{tpu_custom_call.1} parent=31 // loop_exit
          _
        %p276 = scmp.gt.s32.totalorder %s259, 0
        %p277 = scmp.gt.s32.totalorder %s259, 1
        %s278 = scalar_select %p277, %s259, 1
        %s279 = scvt.s32.f32 %s278
        %v280 = vstv %s279
        %v281 = vrcp.pop %v280
        %s282 = vtos %v281
        %s283 = scalar_select %p276, %s282, 0.0
        %v284 = vstv %s283
        %v285 = vmul.f32 %v266, %v284
        %286 = vst [vmem:[#allocation2 + $0x2] sm:$0x1] %v285
        %s287 = sadd.s32 %s194, 3
        %s288 = sld [smem:[#allocation5 + %s287]]
        %s289 = sld [smem:[#allocation6 + %s287]]
        %s290 = ssub.s32 %s289, %s288
        // While loop
        $region62: #{tpu_custom_call.1} parent=31 // loop_pre_header
          _
        $region63: #{tpu_custom_call.1} parent=31 // loop_header
          %s292 = sphi 0, %s294
          %p293 = scmp.ge.s32.totalorder %s292, %s290
          %v297 = vphi 0.0, %v306
        $region64: #{tpu_custom_call.1} parent=31 // loop_header_branch
          %296 = sbr.rel (%p293) target = $region68
        $region65: #{tpu_custom_call.1} parent=31 // loop_body
          %s298 = sadd.s32 %s288, %s292
          %s299 = sld [smem:[#allocation4 + %s298]]
          %p300 = scmp.gt.s32.totalorder %s299, 0
          %s301 = scalar_select %p300, %s299, 0
          %p302 = scmp.lt.s32.totalorder %s301, 999
          %s303 = scalar_select %p302, %s301, 999
          %s304 = scalar_lea.vmem [#allocation7], %s303
          %v305 = vld [vmem:[%s304] sm:$0x1]
          %v306 = vadd.f32 %v297, %v305
        $region66: #{tpu_custom_call.1} parent=31 // loop_footer
          %s294 = sadd.s32 %s292, 1
        $region67: #{tpu_custom_call.1} parent=31 // loop_footer_branch
          %291 = sbr.rel target = $region63
        $region68: #{tpu_custom_call.1} parent=31 // loop_exit
          _
        %p307 = scmp.gt.s32.totalorder %s290, 0
        %p308 = scmp.gt.s32.totalorder %s290, 1
        %s309 = scalar_select %p308, %s290, 1
        %s310 = scvt.s32.f32 %s309
        %v311 = vstv %s310
        %v312 = vrcp.pop %v311
        %s313 = vtos %v312
        %s314 = scalar_select %p307, %s313, 0.0
        %v315 = vstv %s314
        %v316 = vmul.f32 %v297, %v315
        %317 = vst [vmem:[#allocation2 + $0x3] sm:$0x1] %v316
        %s318 = sadd.s32 %s194, 4
        %s319 = sld [smem:[#allocation5 + %s318]]
        %s320 = sld [smem:[#allocation6 + %s318]]
        %s321 = ssub.s32 %s320, %s319
        // While loop
        $region69: #{tpu_custom_call.1} parent=31 // loop_pre_header
          _
        $region70: #{tpu_custom_call.1} parent=31 // loop_header
          %s323 = sphi 0, %s325
          %p324 = scmp.ge.s32.totalorder %s323, %s321
          %v328 = vphi 0.0, %v337
        $region71: #{tpu_custom_call.1} parent=31 // loop_header_branch
          %327 = sbr.rel (%p324) target = $region75
        $region72: #{tpu_custom_call.1} parent=31 // loop_body
          %s329 = sadd.s32 %s319, %s323
          %s330 = sld [smem:[#allocation4 + %s329]]
          %p331 = scmp.gt.s32.totalorder %s330, 0
          %s332 = scalar_select %p331, %s330, 0
          %p333 = scmp.lt.s32.totalorder %s332, 999
          %s334 = scalar_select %p333, %s332, 999
          %s335 = scalar_lea.vmem [#allocation7], %s334
          %v336 = vld [vmem:[%s335] sm:$0x1]
          %v337 = vadd.f32 %v328, %v336
        $region73: #{tpu_custom_call.1} parent=31 // loop_footer
          %s325 = sadd.s32 %s323, 1
        $region74: #{tpu_custom_call.1} parent=31 // loop_footer_branch
          %322 = sbr.rel target = $region70
        $region75: #{tpu_custom_call.1} parent=31 // loop_exit
          _
        %p338 = scmp.gt.s32.totalorder %s321, 0
        %p339 = scmp.gt.s32.totalorder %s321, 1
        %s340 = scalar_select %p339, %s321, 1
        %s341 = scvt.s32.f32 %s340
        %v342 = vstv %s341
        %v343 = vrcp.pop %v342
        %s344 = vtos %v343
        %s345 = scalar_select %p338, %s344, 0.0
        %v346 = vstv %s345
        %v347 = vmul.f32 %v328, %v346
        %348 = vst [vmem:[#allocation2 + $0x4] sm:$0x1] %v347
        %s349 = sadd.s32 %s194, 5
        %s350 = sld [smem:[#allocation5 + %s349]]
        %s351 = sld [smem:[#allocation6 + %s349]]
        %s352 = ssub.s32 %s351, %s350
        // While loop
        $region76: #{tpu_custom_call.1} parent=31 // loop_pre_header
          _
        $region77: #{tpu_custom_call.1} parent=31 // loop_header
          %s354 = sphi 0, %s356
          %p355 = scmp.ge.s32.totalorder %s354, %s352
          %v359 = vphi 0.0, %v368
        $region78: #{tpu_custom_call.1} parent=31 // loop_header_branch
          %358 = sbr.rel (%p355) target = $region82
        $region79: #{tpu_custom_call.1} parent=31 // loop_body
          %s360 = sadd.s32 %s350, %s354
          %s361 = sld [smem:[#allocation4 + %s360]]
          %p362 = scmp.gt.s32.totalorder %s361, 0
          %s363 = scalar_select %p362, %s361, 0
          %p364 = scmp.lt.s32.totalorder %s363, 999
          %s365 = scalar_select %p364, %s363, 999
          %s366 = scalar_lea.vmem [#allocation7], %s365
          %v367 = vld [vmem:[%s366] sm:$0x1]
          %v368 = vadd.f32 %v359, %v367
        $region80: #{tpu_custom_call.1} parent=31 // loop_footer
          %s356 = sadd.s32 %s354, 1
        $region81: #{tpu_custom_call.1} parent=31 // loop_footer_branch
          %353 = sbr.rel target = $region77
        $region82: #{tpu_custom_call.1} parent=31 // loop_exit
          _
        %p369 = scmp.gt.s32.totalorder %s352, 0
        %p370 = scmp.gt.s32.totalorder %s352, 1
        %s371 = scalar_select %p370, %s352, 1
        %s372 = scvt.s32.f32 %s371
        %v373 = vstv %s372
        %v374 = vrcp.pop %v373
        %s375 = vtos %v374
        %s376 = scalar_select %p369, %s375, 0.0
        %v377 = vstv %s376
        %v378 = vmul.f32 %v359, %v377
        %379 = vst [vmem:[#allocation2 + $0x5] sm:$0x1] %v378
        %s380 = sadd.s32 %s194, 6
        %s381 = sld [smem:[#allocation5 + %s380]]
        %s382 = sld [smem:[#allocation6 + %s380]]
        %s383 = ssub.s32 %s382, %s381
        // While loop
        $region83: #{tpu_custom_call.1} parent=31 // loop_pre_header
          _
        $region84: #{tpu_custom_call.1} parent=31 // loop_header
          %s385 = sphi 0, %s387
          %p386 = scmp.ge.s32.totalorder %s385, %s383
          %v390 = vphi 0.0, %v399
        $region85: #{tpu_custom_call.1} parent=31 // loop_header_branch
          %389 = sbr.rel (%p386) target = $region89
        $region86: #{tpu_custom_call.1} parent=31 // loop_body
          %s391 = sadd.s32 %s381, %s385
          %s392 = sld [smem:[#allocation4 + %s391]]
          %p393 = scmp.gt.s32.totalorder %s392, 0
          %s394 = scalar_select %p393, %s392, 0
          %p395 = scmp.lt.s32.totalorder %s394, 999
          %s396 = scalar_select %p395, %s394, 999
          %s397 = scalar_lea.vmem [#allocation7], %s396
          %v398 = vld [vmem:[%s397] sm:$0x1]
          %v399 = vadd.f32 %v390, %v398
        $region87: #{tpu_custom_call.1} parent=31 // loop_footer
          %s387 = sadd.s32 %s385, 1
        $region88: #{tpu_custom_call.1} parent=31 // loop_footer_branch
          %384 = sbr.rel target = $region84
        $region89: #{tpu_custom_call.1} parent=31 // loop_exit
          _
        %p400 = scmp.gt.s32.totalorder %s383, 0
        %p401 = scmp.gt.s32.totalorder %s383, 1
        %s402 = scalar_select %p401, %s383, 1
        %s403 = scvt.s32.f32 %s402
        %v404 = vstv %s403
        %v405 = vrcp.pop %v404
        %s406 = vtos %v405
        %s407 = scalar_select %p400, %s406, 0.0
        %v408 = vstv %s407
        %v409 = vmul.f32 %v390, %v408
        %410 = vst [vmem:[#allocation2 + $0x6] sm:$0x1] %v409
        %s411 = sadd.s32 %s194, 7
        %s412 = sld [smem:[#allocation5 + %s411]]
        %s413 = sld [smem:[#allocation6 + %s411]]
        %s414 = ssub.s32 %s413, %s412
        // While loop
        $region90: #{tpu_custom_call.1} parent=31 // loop_pre_header
          _
        $region91: #{tpu_custom_call.1} parent=31 // loop_header
          %s416 = sphi 0, %s418
          %p417 = scmp.ge.s32.totalorder %s416, %s414
          %v421 = vphi 0.0, %v430
        $region92: #{tpu_custom_call.1} parent=31 // loop_header_branch
          %420 = sbr.rel (%p417) target = $region96
        $region93: #{tpu_custom_call.1} parent=31 // loop_body
          %s422 = sadd.s32 %s412, %s416
          %s423 = sld [smem:[#allocation4 + %s422]]
          %p424 = scmp.gt.s32.totalorder %s423, 0
          %s425 = scalar_select %p424, %s423, 0
          %p426 = scmp.lt.s32.totalorder %s425, 999
          %s427 = scalar_select %p426, %s425, 999
          %s428 = scalar_lea.vmem [#allocation7], %s427
          %v429 = vld [vmem:[%s428] sm:$0x1]
          %v430 = vadd.f32 %v421, %v429
        $region94: #{tpu_custom_call.1} parent=31 // loop_footer
          %s418 = sadd.s32 %s416, 1
        $region95: #{tpu_custom_call.1} parent=31 // loop_footer_branch
          %415 = sbr.rel target = $region91
        $region96: #{tpu_custom_call.1} parent=31 // loop_exit
          _
        %p431 = scmp.gt.s32.totalorder %s414, 0
        %p432 = scmp.gt.s32.totalorder %s414, 1
        %s433 = scalar_select %p432, %s414, 1
        %s434 = scvt.s32.f32 %s433
        %v435 = vstv %s434
        %v436 = vrcp.pop %v435
        %s437 = vtos %v436
        %s438 = scalar_select %p431, %s437, 0.0
        %v439 = vstv %s438
        %v440 = vmul.f32 %v421, %v439
        %441 = vst [vmem:[#allocation2 + $0x7] sm:$0x1] %v440
        %v442 = vld [vmem:[#allocation2] sm:$0xff]
        %v443 = vld [vmem:[#allocation10] sm:$0xff]
        %v444 = vld [vmem:[#allocation10 + $0x8] sm:$0xff]
        %v445 = vld [vmem:[#allocation10 + $0x10] sm:$0xff]
        %v446 = vld [vmem:[#allocation10 + $0x18] sm:$0xff]
        %v447 = vld [vmem:[#allocation10 + $0x20] sm:$0xff]
        %v448 = vld [vmem:[#allocation10 + $0x28] sm:$0xff]
        %v449 = vld [vmem:[#allocation10 + $0x30] sm:$0xff]
        %v450 = vld [vmem:[#allocation10 + $0x38] sm:$0xff]
        %v451 = vld [vmem:[#allocation10 + $0x40] sm:$0xff]
        %v452 = vld [vmem:[#allocation10 + $0x48] sm:$0xff]
        %v453 = vld [vmem:[#allocation10 + $0x50] sm:$0xff]
        %v454 = vld [vmem:[#allocation10 + $0x58] sm:$0xff]
        %v455 = vld [vmem:[#allocation10 + $0x60] sm:$0xff]
        %v456 = vld [vmem:[#allocation10 + $0x68] sm:$0xff]
        %v457 = vld [vmem:[#allocation10 + $0x70] sm:$0xff]
        %v458 = vld [vmem:[#allocation10 + $0x78] sm:$0xff]
        %v459 = vld [vmem:[%s5] sm:$0x1]
        %v461 = vlaneseq
        %v462 = vshrl.u32 %v461, 7
        %v463 = vsub.s32 0, %v462
        %v464 = vrot.slane %v459, %v463
        %466 = vmatprep.subr.mxu0 0.0
        %467 = vmatpush1.msra.mxu0 %v443
        %468 = vmatprep.subr.mxu0 0.0
        %469 = vmatpush1.msra.mxu0 %v444
        %470 = vmatprep.subr.mxu0 0.0
        %471 = vmatpush1.msra.mxu0 %v445
        %472 = vmatprep.subr.mxu0 0.0
        %473 = vmatpush1.msra.mxu0 %v446
        %474 = vmatprep.subr.mxu0 0.0
        %475 = vmatpush1.msra.mxu0 %v447
        %476 = vmatprep.subr.mxu0 0.0
        %477 = vmatpush1.msra.mxu0 %v448
        %478 = vmatprep.subr.mxu0 0.0
        %479 = vmatpush1.msra.mxu0 %v449
        %480 = vmatprep.subr.mxu0 0.0
        %481 = vmatpush1.msra.mxu0 %v450
        %482 = vmatprep.subr.mxu0 0.0
        %483 = vmatpush1.msra.mxu0 %v451
        %484 = vmatprep.subr.mxu0 0.0
        %485 = vmatpush1.msra.mxu0 %v452
        %486 = vmatprep.subr.mxu0 0.0
        %487 = vmatpush1.msra.mxu0 %v453
        %488 = vmatprep.subr.mxu0 0.0
        %489 = vmatpush1.msra.mxu0 %v454
        %490 = vmatprep.subr.mxu0 0.0
        %491 = vmatpush1.msra.mxu0 %v455
        %492 = vmatprep.subr.mxu0 0.0
        %493 = vmatpush1.msra.mxu0 %v456
        %494 = vmatprep.subr.mxu0 0.0
        %495 = vmatpush1.msra.mxu0 %v457
        %496 = vmatprep.subr.mxu0 0.0
        %497 = vmatpush1.msra.mxu0 %v458
        %498 = vmatprep.subr.mxu0 0.0
        %499 = vmatpush1.msra.mxu0 0.0
        %500 = vmatprep.subr.mxu0 0.0
        %501 = vmatpush1.msra.mxu0 0.0
        %502 = vmatprep.subr.mxu0 0.0
        %503 = vmatpush1.msra.mxu0 0.0
        %504 = vmatprep.subr.mxu0 0.0
        %505 = vmatpush1.msra.mxu0 0.0
        %506 = vmatprep.subr.mxu0 0.0
        %507 = vmatpush1.msra.mxu0 0.0
        %508 = vmatprep.subr.mxu0 0.0
        %509 = vmatpush1.msra.mxu0 0.0
        %510 = vmatprep.subr.mxu0 0.0
        %511 = vmatpush1.msra.mxu0 0.0
        %512 = vmatprep.subr.mxu0 0.0
        %513 = vmatpush1.msra.mxu0 0.0
        %514 = vmatprep.subr.mxu0 0.0
        %515 = vmatpush1.msra.mxu0 0.0
        %516 = vmatprep.subr.mxu0 0.0
        %517 = vmatpush1.msra.mxu0 0.0
        %518 = vmatprep.subr.mxu0 0.0
        %519 = vmatpush1.msra.mxu0 0.0
        %520 = vmatprep.subr.mxu0 0.0
        %521 = vmatpush1.msra.mxu0 0.0
        %522 = vmatprep.subr.mxu0 0.0
        %523 = vmatpush1.msra.mxu0 0.0
        %524 = vmatprep.subr.mxu0 0.0
        %525 = vmatpush1.msra.mxu0 0.0
        %526 = vmatprep.subr.mxu0 0.0
        %527 = vmatpush1.msra.mxu0 0.0
        %528 = vmatprep.subr.mxu0 0.0
        %529 = vmatpush1.msra.mxu0 0.0
        %530 = vmatprep.mubr.f32.mxu0 0.0
        %531 = vmatmul.mubr.f32.gmra.mrb[0].mxu0 %v442
        %v532 = vpop.f32.mrb[0].mxu0
        %v533 = vadd.f32 %v464, %v532
        %v534 = vpop.f32.mrb[0].mxu0
        %535 = vdwg.mxu0
        %536 = vst [vmem:[%s193] sm:$0xff] %v533
        %s537 = sand.u32 %s105, 1
        %s538 = scalar_lea.sflag [#allocation9], %s537
        %s539 = sand.u32 %s105, 1
        %s540 = smul.addr %s539, 8
        %s541 = scalar_lea.vmem [#allocation12], %s540
        // Predicated region
        $region97: #{tpu_custom_call.1} parent=31 // pred_check
          %p542 = pneg %p115
        $region98: #{tpu_custom_call.1} parent=31 // pred_check_branch
          %544 = sbr.rel (%p542) target = $region100
        $region99: #{tpu_custom_call.1} parent=31 // pred_region
          %s546 = ssub.s32 128, 128
          %547 = vsyncadd %s538, %s546
          %s548 = smul.addr %s34, 128
          %s549 = scalar_lea.hbm %s6, %s548
          %s551 = sshll.u32 %s541, 4
          %s552 = int_to_ptr.vmem [resolvable:$true] %s551
          %554 = dma.vmem_to_hbm [thread:$0]  %s552, 128, %s549, %s538
        $region100: #{tpu_custom_call.1} parent=31 // pred_fallthru
          _
      $region32: #{tpu_custom_call.1} parent=5 // pred_fallthru
        _
      %p555 = scmp.le.s32.totalorder 2, %s29
      // Predicated region
      $region101: #{tpu_custom_call.1} parent=5 // pred_check
        %p556 = pneg %p555
      $region102: #{tpu_custom_call.1} parent=5 // pred_check_branch
        %558 = sbr.rel (%p556) target = $region104
      $region103: #{tpu_custom_call.1} parent=5 // pred_region
        %s559 = ssub.s32 %s29, 2
        // Predicated region
        $region105: #{tpu_custom_call.1} parent=103 // pred_check
          %p560 = pneg %p121
        $region106: #{tpu_custom_call.1} parent=103 // pred_check_branch
          %562 = sbr.rel (%p560) target = $region108
        $region107: #{tpu_custom_call.1} parent=103 // pred_region
          %s563 = sand.u32 %s106, 1
          %s564 = scalar_lea.sflag [#allocation9], %s563
          %s565 = sand.u32 %s106, 1
          %s566 = smul.addr %s565, 8
          %s567 = scalar_lea.vmem [#allocation12], %s566
          %568 = dma.done %s564, 128
        $region108: #{tpu_custom_call.1} parent=103 // pred_fallthru
          _
      $region104: #{tpu_custom_call.1} parent=5 // pred_fallthru
        _
    $region6: #{tpu_custom_call.1} parent=1 // loop_footer
      %s33 = sadd.s32 1, %s29
    $region7: #{tpu_custom_call.1} parent=1 // loop_footer_branch
      %28 = sbr.rel target = $region3
    $region8: #{tpu_custom_call.1} parent=1 // loop_exit
      _
    %569 = vsyncpa [#allocation8], 1
    %s570 = scalar_lea.sflag [#allocation8], 1
    %571 = vsyncpa %s570, 1
    %572 = vsyncpa [#allocation11], 1
    %573 = vsyncpa [#allocation9], 1
    %s574 = scalar_lea.sflag [#allocation9], 1
    %575 = vsyncpa %s574, 1

</llo_original>
